<compile_context>
chip_gen: v6e
topology: v6e:2x2x1
jax: 0.10.0
libtpu: 0.0.40
codegen_flags: <defaults>
</compile_context>

<pallas_src>
import jax
import jax.numpy as jnp
from jax.experimental import pallas as pl
from jax.experimental.pallas import tpu as pltpu


def _round_up(x: int, m: int) -> int:
    return (x + m - 1) // m * m


def _mlp_kernel(x_ref, w1_ref, b1_ref, w2_ref, b2_ref, w3_ref, o_ref):
    # x: (tb, IN_PAD) bf16; weights pre-transposed to (in, out) bf16; biases fp32.
    x = x_ref[...]

    h = jnp.dot(x, w1_ref[...], preferred_element_type=jnp.float32)
    h = jnp.maximum(h + b1_ref[...], 0.0)                 # fp32 bias + ReLU

    h = jnp.dot(h.astype(jnp.bfloat16), w2_ref[...],
                preferred_element_type=jnp.float32)
    h = jnp.maximum(h + b2_ref[...], 0.0)

    o_ref[...] = jnp.dot(h.astype(jnp.bfloat16), w3_ref[...],
                         preferred_element_type=jnp.float32).astype(o_ref.dtype)


def interaction_mlp(x, params, *, batch_tile=None):
    """x: (B, S, D) float32.  params: PyTorch-convention w (out,in), b (out,)."""
    B = x.shape[0]
    x_flat = x.reshape(B, -1)                              # == torch x.view(B, -1)
    in_dim = x_flat.shape[1]

    w1, b1, w2, b2, w3 = (params["w1"], params["b1"], params["w2"],
                          params["b2"], params["w3"])
    h1, h2, out_dim = w1.shape[0], w2.shape[0], w3.shape[0]

    # ---- pad every feature dim to a multiple of 128 lanes ----
    IN_PAD = _round_up(in_dim, 128)
    H1_PAD = _round_up(h1, 128)
    H2_PAD = _round_up(h2, 128)
    OUT_PAD = _round_up(out_dim, 128)

    # ---- batch tiling sized from a VMEM budget ----
    # Resident weights + biases (bf16 / fp32):
    weight_bytes = 2 * (IN_PAD * H1_PAD + H1_PAD * H2_PAD + H2_PAD * OUT_PAD) \
        + 4 * (H1_PAD + H2_PAD)
    # Double-buffered x tile (bf16) + out tile (fp32), per batch row:
    per_row_bytes = 2 * (IN_PAD * 2 + OUT_PAD * 4)
    act_budget = 16 * 1024 * 1024                          # activations budget
    tb_fit = max(8, (act_budget // per_row_bytes) // 8 * 8)

    B8 = _round_up(B, 8)
    tb = batch_tile if batch_tile is not None else min(512, B8, tb_fit)
    tb = max(8, _round_up(tb, 8))
    B_PAD = _round_up(B8, tb)
    grid = (B_PAD // tb,)

    vmem_limit = min(64 * 1024 * 1024,
                     weight_bytes + tb * per_row_bytes + 8 * 1024 * 1024)

    # ---- one-time host-side prep: pad, transpose, cast ----
    x_p = jnp.pad(x_flat, ((0, B_PAD - B), (0, IN_PAD - in_dim))).astype(jnp.bfloat16)

    w1t = jnp.pad(w1.T, ((0, IN_PAD - in_dim), (0, H1_PAD - h1))).astype(jnp.bfloat16)
    w2t = jnp.pad(w2.T, ((0, H1_PAD - h1), (0, H2_PAD - h2))).astype(jnp.bfloat16)
    w3t = jnp.pad(w3.T, ((0, H2_PAD - h2), (0, OUT_PAD - out_dim))).astype(jnp.bfloat16)
    b1p = jnp.pad(b1.reshape(1, -1), ((0, 0), (0, H1_PAD - h1))).astype(jnp.float32)
    b2p = jnp.pad(b2.reshape(1, -1), ((0, 0), (0, H2_PAD - h2))).astype(jnp.float32)

    out = pl.pallas_call(
        _mlp_kernel,
        out_shape=jax.ShapeDtypeStruct((B_PAD, OUT_PAD), jnp.float32),
        grid_spec=pltpu.PrefetchScalarGridSpec(
            num_scalar_prefetch=0,
            grid=grid,
            in_specs=[
                # batch-tiled activations (double-buffered across grid steps)
                pl.BlockSpec((tb, IN_PAD), lambda i: (i, 0)),
                # weights / biases: same block every step -> resident in VMEM
                pl.BlockSpec((IN_PAD, H1_PAD), lambda i: (0, 0)),
                pl.BlockSpec((1, H1_PAD),      lambda i: (0, 0)),
                pl.BlockSpec((H1_PAD, H2_PAD), lambda i: (0, 0)),
                pl.BlockSpec((1, H2_PAD),      lambda i: (0, 0)),
                pl.BlockSpec((H2_PAD, OUT_PAD), lambda i: (0, 0)),
            ],
            out_specs=pl.BlockSpec((tb, OUT_PAD), lambda i: (i, 0)),
        ),
        compiler_params=pltpu.CompilerParams(
            dimension_semantics=("parallel",),
            vmem_limit_bytes=int(vmem_limit),
        ),
    )(x_p, w1t, b1p, w2t, b2p, w3t)

    # strip batch / lane padding
    return out[:B, :out_dim]


def init_params(key, input_size, sequence_length, hidden_sizes, output_size):
    """Deterministic init matching nn.Linear: weight (out, in), bias (out,)."""
    actual_in = input_size * sequence_length
    h1, h2 = hidden_sizes
    k1, k2, k3, k4, k5 = jax.random.split(key, 5)

    def u(k, shape, fan_in):
        bound = 1.0 / jnp.sqrt(fan_in)
        return jax.random.uniform(k, shape, jnp.float32, -bound, bound)

    return {
        "w1": u(k1, (h1, actual_in), actual_in),
        "b1": u(k2, (h1,), actual_in),
        "w2": u(k3, (h2, h1), h1),
        "b2": u(k4, (h2,), h1),
        "w3": u(k5, (output_size, h2), h2),   # final Linear: bias=False
    }


def reference_mlp(x, params):
    x = x.reshape(x.shape[0], -1)
    h = jnp.maximum(x @ params["w1"].T + params["b1"], 0.0)
    h = jnp.maximum(h @ params["w2"].T + params["b2"], 0.0)
    return h @ params["w3"].T


if __name__ == "__main__":
    # Small shapes consistent with the module's forward.
    batch = 8
    input_size = 8
    sequence_length = 4
    hidden_sizes = [64, 32]
    output_size = 16

    key = jax.random.PRNGKey(0)
    kx, kp = jax.random.split(key)
    x = jax.random.normal(kx, (batch, sequence_length, input_size), jnp.float32)
    params = init_params(kp, input_size, sequence_length, hidden_sizes, output_size)

    out = interaction_mlp(x, params)
    out = jax.block_until_ready(out)

    ref = reference_mlp(x, params)
    assert out.shape == (batch, output_size)
    # bf16 matmul operands (fp32 accumulation) -> compare with a bf16-level tolerance.
    assert jnp.allclose(out, ref, atol=2e-2, rtol=2e-2), (
        f"max abs err {jnp.max(jnp.abs(out - ref))}")
    print("KERNEL_OK")
</pallas_src>

<mosaic_0001>
module attributes {stable_mosaic.version = 11 : i64} {
  func.func @_mlp_kernel(%arg0: i32, %arg1: memref<8x128xbf16, #tpu.memory_space<vmem>>, %arg2: memref<128x128xbf16, #tpu.memory_space<vmem>>, %arg3: memref<1x128xf32, #tpu.memory_space<vmem>>, %arg4: memref<128x128xbf16, #tpu.memory_space<vmem>>, %arg5: memref<1x128xf32, #tpu.memory_space<vmem>>, %arg6: memref<128x128xbf16, #tpu.memory_space<vmem>>, %arg7: memref<8x128xf32, #tpu.memory_space<vmem>>) attributes {dimension_semantics = [#tpu.dimension_semantics<parallel>], iteration_bounds = array<i64: 1>, scalar_prefetch = 0 : i64, scratch_operands = 0 : i64, tpu.core_type = #tpu.core_type<tc>, window_params = [{transform_indices = @transform_0, window_bounds = array<i64: 8, 128>}, {pipeline_mode = #tpu.pipeline_mode<synchronous>, transform_indices = @transform_1, window_bounds = array<i64: 128, 128>}, {pipeline_mode = #tpu.pipeline_mode<synchronous>, transform_indices = @transform_2, window_bounds = array<i64: 1, 128>}, {pipeline_mode = #tpu.pipeline_mode<synchronous>, transform_indices = @transform_3, window_bounds = array<i64: 128, 128>}, {pipeline_mode = #tpu.pipeline_mode<synchronous>, transform_indices = @transform_4, window_bounds = array<i64: 1, 128>}, {pipeline_mode = #tpu.pipeline_mode<synchronous>, transform_indices = @transform_5, window_bounds = array<i64: 128, 128>}, {transform_indices = @transform_6, window_bounds = array<i64: 8, 128>}]} {
    %c0 = arith.constant 0 : index
    %c0_0 = arith.constant 0 : index
    %0 = vector.load %arg1[%c0, %c0_0] : memref<8x128xbf16, #tpu.memory_space<vmem>>, vector<8x128xbf16>
    %c0_1 = arith.constant 0 : index
    %c0_2 = arith.constant 0 : index
    %1 = vector.load %arg2[%c0_1, %c0_2] : memref<128x128xbf16, #tpu.memory_space<vmem>>, vector<128x128xbf16>
    %cst = arith.constant dense<0.000000e+00> : vector<8x128xf32>
    %2 = tpu.matmul %0, %1, %cst {dimension_numbers = #tpu.dot_dimension_numbers<[1], [0], [0], [1], [0, 0, 1, 1], [], []>} : vector<8x128xbf16>, vector<128x128xbf16>, vector<8x128xf32> -> vector<8x128xf32>
    %c0_3 = arith.constant 0 : index
    %c0_4 = arith.constant 0 : index
    %3 = vector.load %arg3[%c0_3, %c0_4] : memref<1x128xf32, #tpu.memory_space<vmem>>, vector<1x128xf32>
    %4 = vector.broadcast %3 : vector<1x128xf32> to vector<8x128xf32>
    %5 = arith.addf %2, %4 : vector<8x128xf32>
    %cst_5 = arith.constant 0.000000e+00 : f32
    %6 = vector.broadcast %cst_5 : f32 to vector<8x128xf32>
    %7 = arith.maximumf %5, %6 : vector<8x128xf32>
    %8 = arith.truncf %7 : vector<8x128xf32> to vector<8x128xbf16>
    %c0_6 = arith.constant 0 : index
    %c0_7 = arith.constant 0 : index
    %9 = vector.load %arg4[%c0_6, %c0_7] : memref<128x128xbf16, #tpu.memory_space<vmem>>, vector<128x128xbf16>
    %cst_8 = arith.constant dense<0.000000e+00> : vector<8x128xf32>
    %10 = tpu.matmul %8, %9, %cst_8 {dimension_numbers = #tpu.dot_dimension_numbers<[1], [0], [0], [1], [0, 0, 1, 1], [], []>} : vector<8x128xbf16>, vector<128x128xbf16>, vector<8x128xf32> -> vector<8x128xf32>
    %c0_9 = arith.constant 0 : index
    %c0_10 = arith.constant 0 : index
    %11 = vector.load %arg5[%c0_9, %c0_10] : memref<1x128xf32, #tpu.memory_space<vmem>>, vector<1x128xf32>
    %12 = vector.broadcast %11 : vector<1x128xf32> to vector<8x128xf32>
    %13 = arith.addf %10, %12 : vector<8x128xf32>
    %cst_11 = arith.constant 0.000000e+00 : f32
    %14 = vector.broadcast %cst_11 : f32 to vector<8x128xf32>
    %15 = arith.maximumf %13, %14 : vector<8x128xf32>
    %16 = arith.truncf %15 : vector<8x128xf32> to vector<8x128xbf16>
    %c0_12 = arith.constant 0 : index
    %c0_13 = arith.constant 0 : index
    %17 = vector.load %arg6[%c0_12, %c0_13] : memref<128x128xbf16, #tpu.memory_space<vmem>>, vector<128x128xbf16>
    %cst_14 = arith.constant dense<0.000000e+00> : vector<8x128xf32>
    %18 = tpu.matmul %16, %17, %cst_14 {dimension_numbers = #tpu.dot_dimension_numbers<[1], [0], [0], [1], [0, 0, 1, 1], [], []>} : vector<8x128xbf16>, vector<128x128xbf16>, vector<8x128xf32> -> vector<8x128xf32>
    %c0_15 = arith.constant 0 : index
    %c0_16 = arith.constant 0 : index
    %19 = vector.load %arg7[%c0_15, %c0_16] : memref<8x128xf32, #tpu.memory_space<vmem>>, vector<8x128xf32>
    tpu.vector_store %arg7[%c0_15, %c0_16], %18 {strides = array<i32>} : memref<8x128xf32, #tpu.memory_space<vmem>>, vector<8x128xf32>,
    return
  }
  func.func @transform_0(%arg0: i32) -> (i32, i32) {
    %c0_i32 = arith.constant 0 : i32
    %c0_i32_0 = arith.constant 0 : i32
    return %arg0, %c0_i32 : i32, i32
  }
  func.func @transform_1(%arg0: i32) -> (i32, i32) {
    %c0_i32 = arith.constant 0 : i32
    %c0_i32_0 = arith.constant 0 : i32
    %c0_i32_1 = arith.constant 0 : i32
    return %c0_i32, %c0_i32_0 : i32, i32
  }
  func.func @transform_2(%arg0: i32) -> (i32, i32) {
    %c0_i32 = arith.constant 0 : i32
    %c0_i32_0 = arith.constant 0 : i32
    %c0_i32_1 = arith.constant 0 : i32
    return %c0_i32, %c0_i32_0 : i32, i32
  }
  func.func @transform_3(%arg0: i32) -> (i32, i32) {
    %c0_i32 = arith.constant 0 : i32
    %c0_i32_0 = arith.constant 0 : i32
    %c0_i32_1 = arith.constant 0 : i32
    return %c0_i32, %c0_i32_0 : i32, i32
  }
  func.func @transform_4(%arg0: i32) -> (i32, i32) {
    %c0_i32 = arith.constant 0 : i32
    %c0_i32_0 = arith.constant 0 : i32
    %c0_i32_1 = arith.constant 0 : i32
    return %c0_i32, %c0_i32_0 : i32, i32
  }
  func.func @transform_5(%arg0: i32) -> (i32, i32) {
    %c0_i32 = arith.constant 0 : i32
    %c0_i32_0 = arith.constant 0 : i32
    %c0_i32_1 = arith.constant 0 : i32
    return %c0_i32, %c0_i32_0 : i32, i32
  }
  func.func @transform_6(%arg0: i32) -> (i32, i32) {
    %c0_i32 = arith.constant 0 : i32
    %c0_i32_0 = arith.constant 0 : i32
    return %arg0, %c0_i32 : i32, i32
  }
}

</mosaic_0001>

<llo_original>
// kernel: tpu_custom_call.1
$region0: #{tpu_custom_call.1}
  #allocation0 [shape = 'u32[]', space=smem, size = 0x4, offset = 0x4, fixed_abs, tag = 'smem constant byte address 0x4 - core index']
  #allocation1 [shape = 'u32[144,128]{1,0:T(1,128)}', space=vmem, size = 0x12000, scoped, tag = 'internal scratch']
  %s0 = inlined_call_operand.hbm [shape: bf16[8,128], index: 0, kind: input, shape index: {}]
  %s1 = inlined_call_operand.hbm [shape: bf16[128,128], index: 1, kind: input, shape index: {}]
  %s2 = inlined_call_operand.vmem [shape: f32[1,128], index: 2, kind: input, shape index: {}]
  %s3 = inlined_call_operand.hbm [shape: bf16[128,128], index: 3, kind: input, shape index: {}]
  %s4 = inlined_call_operand.vmem [shape: f32[1,128], index: 4, kind: input, shape index: {}]
  %s5 = inlined_call_operand.hbm [shape: bf16[128,128], index: 5, kind: input, shape index: {}]
  %s6 = inlined_call_operand.hbm [shape: f32[8,128], index: 6, kind: output, shape index: {}]
  %s7 = sld [smem:[#allocation0]]
  $region50: #{tpu_custom_call.1} parent=0
    _
  %s9 = ssub.s32 1, %s7
  %s10 = scalar_select 0, %s9, %s7
  $region1: #{tpu_custom_call.1} parent=0
    #allocation2 [shape = 'u8[2048]{0}', space=vmem, size = 0x800, scoped, tag = 'input window, operand 0, single buffered']
    #allocation3 [shape = 's32[1]{0}', space=sflag, size = 0x4, scoped, tag = 'scoped memory for tpu_custom_call.1']
    #allocation4 [shape = 's32[1]{0}', space=sflag, size = 0x4, scoped, tag = 'scoped memory for tpu_custom_call.1']
    #allocation5 [shape = 'u8[32768]{0}', space=vmem, size = 0x8000, scoped, tag = 'input window, operand 1, single buffered']
    #allocation6 [shape = 's32[1]{0}', space=sflag, size = 0x4, scoped, tag = 'scoped memory for tpu_custom_call.1']
    #allocation7 [shape = 'u8[32768]{0}', space=vmem, size = 0x8000, scoped, tag = 'input window, operand 3, single buffered']
    #allocation8 [shape = 'u8[32768]{0}', space=vmem, size = 0x8000, scoped, tag = 'input window, operand 5, single buffered']
    #allocation9 [shape = 's32[1]{0}', space=sflag, size = 0x4, scoped, tag = 'scoped memory for tpu_custom_call.1']
    #allocation10 [shape = 'u8[4096]{0}', space=vmem, size = 0x1000, scoped, tag = 'output window, operand 0, single buffered']
    %11 = vsyncpa [#allocation3], 0
    %12 = vsyncpa [#allocation6], 0
    %13 = vsyncpa [#allocation9], 0
    %14 = vsyncpa [#allocation4], 0
    // Predicated region
    $region2: #{tpu_custom_call.1} parent=1 // pred_check
      _
    $region3: #{tpu_custom_call.1} parent=1 // pred_check_branch
      %16 = sbr.rel (0) target = $region5
    $region4: #{tpu_custom_call.1} parent=1 // pred_region
      %s18 = ssub.s32 64, 64
      %19 = vsyncadd [#allocation3], %s18
      %s21 = sshll.u32 [#allocation2], 4
      %s22 = int_to_ptr.vmem [resolvable:$true] %s21
      %24 = dma.hbm_to_vmem [thread:$0]  %s0, 64, %s22, [#allocation3]
    $region5: #{tpu_custom_call.1} parent=1 // pred_fallthru
      _
    // Predicated region
    $region6: #{tpu_custom_call.1} parent=1 // pred_check
      _
    $region7: #{tpu_custom_call.1} parent=1 // pred_check_branch
      %26 = sbr.rel (0) target = $region9
    $region8: #{tpu_custom_call.1} parent=1 // pred_region
      %s28 = ssub.s32 1024, 1024
      %29 = vsyncadd [#allocation6], %s28
      %s30 = sshll.u32 [#allocation5], 4
      %s31 = int_to_ptr.vmem [resolvable:$true] %s30
      %36 = dma.hbm_to_vmem [thread:$0]  %s1, 1024, %s31, [#allocation6], 64, 64, 4
    $region9: #{tpu_custom_call.1} parent=1 // pred_fallthru
      _
    // Predicated region
    $region10: #{tpu_custom_call.1} parent=1 // pred_check
      _
    $region11: #{tpu_custom_call.1} parent=1 // pred_check_branch
      %38 = sbr.rel (0) target = $region13
    $region12: #{tpu_custom_call.1} parent=1 // pred_region
      _
    $region13: #{tpu_custom_call.1} parent=1 // pred_fallthru
      _
    // Predicated region
    $region14: #{tpu_custom_call.1} parent=1 // pred_check
      _
    $region15: #{tpu_custom_call.1} parent=1 // pred_check_branch
      %40 = sbr.rel (0) target = $region17
    $region16: #{tpu_custom_call.1} parent=1 // pred_region
      %s42 = ssub.s32 1024, 1024
      %43 = vsyncadd [#allocation6], %s42
      %s44 = sshll.u32 [#allocation7], 4
      %s45 = int_to_ptr.vmem [resolvable:$true] %s44
      %50 = dma.hbm_to_vmem [thread:$0]  %s3, 1024, %s45, [#allocation6], 64, 64, 4
    $region17: #{tpu_custom_call.1} parent=1 // pred_fallthru
      _
    // Predicated region
    $region18: #{tpu_custom_call.1} parent=1 // pred_check
      _
    $region19: #{tpu_custom_call.1} parent=1 // pred_check_branch
      %52 = sbr.rel (0) target = $region21
    $region20: #{tpu_custom_call.1} parent=1 // pred_region
      _
    $region21: #{tpu_custom_call.1} parent=1 // pred_fallthru
      _
    // Predicated region
    $region22: #{tpu_custom_call.1} parent=1 // pred_check
      _
    $region23: #{tpu_custom_call.1} parent=1 // pred_check_branch
      %54 = sbr.rel (0) target = $region25
    $region24: #{tpu_custom_call.1} parent=1 // pred_region
      %s56 = ssub.s32 1024, 1024
      %57 = vsyncadd [#allocation9], %s56
      %s58 = sshll.u32 [#allocation8], 4
      %s59 = int_to_ptr.vmem [resolvable:$true] %s58
      %64 = dma.hbm_to_vmem [thread:$0]  %s5, 1024, %s59, [#allocation9], 64, 64, 4
    $region25: #{tpu_custom_call.1} parent=1 // pred_fallthru
      _
    // Predicated region
    $region26: #{tpu_custom_call.1} parent=1 // pred_check
      _
    $region27: #{tpu_custom_call.1} parent=1 // pred_check_branch
      %66 = sbr.rel (0) target = $region29
    $region28: #{tpu_custom_call.1} parent=1 // pred_region
      %67 = dma.done [#allocation3], 64
    $region29: #{tpu_custom_call.1} parent=1 // pred_fallthru
      _
    // Predicated region
    $region30: #{tpu_custom_call.1} parent=1 // pred_check
      _
    $region31: #{tpu_custom_call.1} parent=1 // pred_check_branch
      %69 = sbr.rel (0) target = $region33
    $region32: #{tpu_custom_call.1} parent=1 // pred_region
      %70 = dma.done [#allocation6], 1024
    $region33: #{tpu_custom_call.1} parent=1 // pred_fallthru
      _
    // Predicated region
    $region34: #{tpu_custom_call.1} parent=1 // pred_check
      _
    $region35: #{tpu_custom_call.1} parent=1 // pred_check_branch
      %72 = sbr.rel (0) target = $region37
    $region36: #{tpu_custom_call.1} parent=1 // pred_region
      %73 = dma.done [#allocation6], 1024
    $region37: #{tpu_custom_call.1} parent=1 // pred_fallthru
      _
    // Predicated region
    $region38: #{tpu_custom_call.1} parent=1 // pred_check
      _
    $region39: #{tpu_custom_call.1} parent=1 // pred_check_branch
      %75 = sbr.rel (0) target = $region41
    $region40: #{tpu_custom_call.1} parent=1 // pred_region
      %76 = dma.done [#allocation9], 1024
    $region41: #{tpu_custom_call.1} parent=1 // pred_fallthru
      _
    %v78 = vld [vmem:[#allocation2] sm:$0xf]
    %v79 = vld [vmem:[#allocation5] sm:$0xf]
    %v80 = vld [vmem:[#allocation5 + $0x4] sm:$0xf]
    %v81 = vld [vmem:[#allocation5 + $0x8] sm:$0xf]
    %v82 = vld [vmem:[#allocation5 + $0xc] sm:$0xf]
    %v83 = vld [vmem:[#allocation5 + $0x10] sm:$0xf]
    %v84 = vld [vmem:[#allocation5 + $0x14] sm:$0xf]
    %v85 = vld [vmem:[#allocation5 + $0x18] sm:$0xf]
    %v86 = vld [vmem:[#allocation5 + $0x1c] sm:$0xf]
    %v87 = vld [vmem:[#allocation5 + $0x20] sm:$0xf]
    %v88 = vld [vmem:[#allocation5 + $0x24] sm:$0xf]
    %v89 = vld [vmem:[#allocation5 + $0x28] sm:$0xf]
    %v90 = vld [vmem:[#allocation5 + $0x2c] sm:$0xf]
    %v91 = vld [vmem:[#allocation5 + $0x30] sm:$0xf]
    %v92 = vld [vmem:[#allocation5 + $0x34] sm:$0xf]
    %v93 = vld [vmem:[#allocation5 + $0x38] sm:$0xf]
    %v94 = vld [vmem:[#allocation5 + $0x3c] sm:$0xf]
    %v95 = vld [vmem:[%s2] sm:$0x1]
    %v97 = vlaneseq
    %v98 = vshrl.u32 %v97, 7
    %v99 = vsub.s32 0, %v98
    %v100 = vrot.slane %v95, %v99
    %v118 = vunpack.c.l.b16 %v79
    %v119 = vunpack.c.l.b16 %v80
    %v120 = vunpack.c.l.b16 %v81
    %v121 = vunpack.c.l.b16 %v82
    %v122 = vunpack.c.l.b16 %v83
    %v123 = vunpack.c.l.b16 %v84
    %v124 = vunpack.c.l.b16 %v85
    %v125 = vunpack.c.l.b16 %v86
    %v126 = vunpack.c.l.b16 %v87
    %v127 = vunpack.c.l.b16 %v88
    %v128 = vunpack.c.l.b16 %v89
    %v129 = vunpack.c.l.b16 %v90
    %v130 = vunpack.c.l.b16 %v91
    %v131 = vunpack.c.l.b16 %v92
    %v132 = vunpack.c.l.b16 %v93
    %v133 = vunpack.c.l.b16 %v94
    %v134 = vpack.c.b16 %v119, %v118
    %v135 = vpack.c.b16 %v121, %v120
    %v136 = vpack.c.b16 %v123, %v122
    %v137 = vpack.c.b16 %v125, %v124
    %v138 = vpack.c.b16 %v127, %v126
    %v139 = vpack.c.b16 %v129, %v128
    %v140 = vpack.c.b16 %v131, %v130
    %v141 = vpack.c.b16 %v133, %v132
    %150 = vmatprep.subr.bf16.mxu0 0
    %151 = vmatpush1.bf16.msra.mxu0 %v141
    %152 = vmatprep.subr.bf16.mxu0 0
    %153 = vmatpush1.bf16.msra.mxu0 %v140
    %154 = vmatprep.subr.bf16.mxu0 0
    %155 = vmatpush1.bf16.msra.mxu0 %v139
    %156 = vmatprep.subr.bf16.mxu0 0
    %157 = vmatpush1.bf16.msra.mxu0 %v138
    %158 = vmatprep.subr.bf16.mxu0 0
    %159 = vmatpush1.bf16.msra.mxu0 %v137
    %160 = vmatprep.subr.bf16.mxu0 0
    %161 = vmatpush1.bf16.msra.mxu0 %v136
    %162 = vmatprep.subr.bf16.mxu0 0
    %163 = vmatpush1.bf16.msra.mxu0 %v135
    %164 = vmatprep.subr.bf16.mxu0 0
    %165 = vmatpush1.bf16.msra.mxu0 %v134
    %166 = vmatprep.subr.bf16.mxu0 0
    %167 = vmatpush2.bf16.msra.mxu0 0
    %168 = vmatprep.subr.bf16.mxu0 0
    %169 = vmatpush2.bf16.msra.mxu0 0
    %170 = vmatprep.subr.bf16.mxu0 0
    %171 = vmatpush2.bf16.msra.mxu0 0
    %172 = vmatprep.subr.bf16.mxu0 0
    %173 = vmatpush2.bf16.msra.mxu0 0
    %174 = vmatprep.subr.bf16.mxu0 0
    %175 = vmatpush2.bf16.msra.mxu0 0
    %176 = vmatprep.subr.bf16.mxu0 0
    %177 = vmatpush2.bf16.msra.mxu0 0
    %178 = vmatprep.subr.bf16.mxu0 0
    %179 = vmatpush2.bf16.msra.mxu0 0
    %180 = vmatprep.subr.bf16.mxu0 0
    %181 = vmatpush2.bf16.msra.mxu0 0
    %182 = vmatprep.mubr.bf16.mxu0 0
    %183 = vmatmul.mubr.bf16.gmra.mxu0 %v78
    %v184 = vpop.f32.mrf.mxu0
    %v185 = vadd.f32 %v100, %v184
    %v186 = vpop.f32.mrf.mxu0
    %v187 = vpop.f32.mrf.mxu0
    %v188 = vpop.f32.mrf.mxu0
    %189 = vdwg.mxu0
    %v190 = vmax.f32 %v185, 0.0
    %v191 = vpack.c.bf16 %v190, %v190
    %v192 = vld [vmem:[#allocation7] sm:$0xf]
    %v193 = vld [vmem:[#allocation7 + $0x4] sm:$0xf]
    %v194 = vld [vmem:[#allocation7 + $0x8] sm:$0xf]
    %v195 = vld [vmem:[#allocation7 + $0xc] sm:$0xf]
    %v196 = vld [vmem:[#allocation7 + $0x10] sm:$0xf]
    %v197 = vld [vmem:[#allocation7 + $0x14] sm:$0xf]
    %v198 = vld [vmem:[#allocation7 + $0x18] sm:$0xf]
    %v199 = vld [vmem:[#allocation7 + $0x1c] sm:$0xf]
    %v200 = vld [vmem:[#allocation7 + $0x20] sm:$0xf]
    %v201 = vld [vmem:[#allocation7 + $0x24] sm:$0xf]
    %v202 = vld [vmem:[#allocation7 + $0x28] sm:$0xf]
    %v203 = vld [vmem:[#allocation7 + $0x2c] sm:$0xf]
    %v204 = vld [vmem:[#allocation7 + $0x30] sm:$0xf]
    %v205 = vld [vmem:[#allocation7 + $0x34] sm:$0xf]
    %v206 = vld [vmem:[#allocation7 + $0x38] sm:$0xf]
    %v207 = vld [vmem:[#allocation7 + $0x3c] sm:$0xf]
    %v208 = vld [vmem:[%s4] sm:$0x1]
    %v210 = vlaneseq
    %v211 = vshrl.u32 %v210, 7
    %v212 = vsub.s32 0, %v211
    %v213 = vrot.slane %v208, %v212
    %v231 = vunpack.c.l.b16 %v192
    %v232 = vunpack.c.l.b16 %v193
    %v233 = vunpack.c.l.b16 %v194
    %v234 = vunpack.c.l.b16 %v195
    %v235 = vunpack.c.l.b16 %v196
    %v236 = vunpack.c.l.b16 %v197
    %v237 = vunpack.c.l.b16 %v198
    %v238 = vunpack.c.l.b16 %v199
    %v239 = vunpack.c.l.b16 %v200
    %v240 = vunpack.c.l.b16 %v201
    %v241 = vunpack.c.l.b16 %v202
    %v242 = vunpack.c.l.b16 %v203
    %v243 = vunpack.c.l.b16 %v204
    %v244 = vunpack.c.l.b16 %v205
    %v245 = vunpack.c.l.b16 %v206
    %v246 = vunpack.c.l.b16 %v207
    %v247 = vpack.c.b16 %v232, %v231
    %v248 = vpack.c.b16 %v234, %v233
    %v249 = vpack.c.b16 %v236, %v235
    %v250 = vpack.c.b16 %v238, %v237
    %v251 = vpack.c.b16 %v240, %v239
    %v252 = vpack.c.b16 %v242, %v241
    %v253 = vpack.c.b16 %v244, %v243
    %v254 = vpack.c.b16 %v246, %v245
    %263 = vmatprep.subr.bf16.mxu0 0
    %264 = vmatpush1.bf16.msra.mxu0 %v254
    %265 = vmatprep.subr.bf16.mxu0 0
    %266 = vmatpush1.bf16.msra.mxu0 %v253
    %267 = vmatprep.subr.bf16.mxu0 0
    %268 = vmatpush1.bf16.msra.mxu0 %v252
    %269 = vmatprep.subr.bf16.mxu0 0
    %270 = vmatpush1.bf16.msra.mxu0 %v251
    %271 = vmatprep.subr.bf16.mxu0 0
    %272 = vmatpush1.bf16.msra.mxu0 %v250
    %273 = vmatprep.subr.bf16.mxu0 0
    %274 = vmatpush1.bf16.msra.mxu0 %v249
    %275 = vmatprep.subr.bf16.mxu0 0
    %276 = vmatpush1.bf16.msra.mxu0 %v248
    %277 = vmatprep.subr.bf16.mxu0 0
    %278 = vmatpush1.bf16.msra.mxu0 %v247
    %279 = vmatprep.subr.bf16.mxu0 0
    %280 = vmatpush2.bf16.msra.mxu0 0
    %281 = vmatprep.subr.bf16.mxu0 0
    %282 = vmatpush2.bf16.msra.mxu0 0
    %283 = vmatprep.subr.bf16.mxu0 0
    %284 = vmatpush2.bf16.msra.mxu0 0
    %285 = vmatprep.subr.bf16.mxu0 0
    %286 = vmatpush2.bf16.msra.mxu0 0
    %287 = vmatprep.subr.bf16.mxu0 0
    %288 = vmatpush2.bf16.msra.mxu0 0
    %289 = vmatprep.subr.bf16.mxu0 0
    %290 = vmatpush2.bf16.msra.mxu0 0
    %291 = vmatprep.subr.bf16.mxu0 0
    %292 = vmatpush2.bf16.msra.mxu0 0
    %293 = vmatprep.subr.bf16.mxu0 0
    %294 = vmatpush2.bf16.msra.mxu0 0
    %295 = vmatprep.mubr.bf16.mxu0 0
    %296 = vmatmul.mubr.bf16.gmra.mxu0 %v191
    %v297 = vpop.f32.mrf.mxu0
    %v298 = vadd.f32 %v213, %v297
    %v299 = vpop.f32.mrf.mxu0
    %v300 = vpop.f32.mrf.mxu0
    %v301 = vpop.f32.mrf.mxu0
    %302 = vdwg.mxu0
    %v303 = vmax.f32 %v298, 0.0
    %v304 = vpack.c.bf16 %v303, %v303
    %v305 = vld [vmem:[#allocation8] sm:$0xf]
    %v306 = vld [vmem:[#allocation8 + $0x4] sm:$0xf]
    %v307 = vld [vmem:[#allocation8 + $0x8] sm:$0xf]
    %v308 = vld [vmem:[#allocation8 + $0xc] sm:$0xf]
    %v309 = vld [vmem:[#allocation8 + $0x10] sm:$0xf]
    %v310 = vld [vmem:[#allocation8 + $0x14] sm:$0xf]
    %v311 = vld [vmem:[#allocation8 + $0x18] sm:$0xf]
    %v312 = vld [vmem:[#allocation8 + $0x1c] sm:$0xf]
    %v313 = vld [vmem:[#allocation8 + $0x20] sm:$0xf]
    %v314 = vld [vmem:[#allocation8 + $0x24] sm:$0xf]
    %v315 = vld [vmem:[#allocation8 + $0x28] sm:$0xf]
    %v316 = vld [vmem:[#allocation8 + $0x2c] sm:$0xf]
    %v317 = vld [vmem:[#allocation8 + $0x30] sm:$0xf]
    %v318 = vld [vmem:[#allocation8 + $0x34] sm:$0xf]
    %v319 = vld [vmem:[#allocation8 + $0x38] sm:$0xf]
    %v320 = vld [vmem:[#allocation8 + $0x3c] sm:$0xf]
    %v337 = vunpack.c.l.b16 %v305
    %v338 = vunpack.c.l.b16 %v306
    %v339 = vunpack.c.l.b16 %v307
    %v340 = vunpack.c.l.b16 %v308
    %v341 = vunpack.c.l.b16 %v309
    %v342 = vunpack.c.l.b16 %v310
    %v343 = vunpack.c.l.b16 %v311
    %v344 = vunpack.c.l.b16 %v312
    %v345 = vunpack.c.l.b16 %v313
    %v346 = vunpack.c.l.b16 %v314
    %v347 = vunpack.c.l.b16 %v315
    %v348 = vunpack.c.l.b16 %v316
    %v349 = vunpack.c.l.b16 %v317
    %v350 = vunpack.c.l.b16 %v318
    %v351 = vunpack.c.l.b16 %v319
    %v352 = vunpack.c.l.b16 %v320
    %v353 = vpack.c.b16 %v338, %v337
    %v354 = vpack.c.b16 %v340, %v339
    %v355 = vpack.c.b16 %v342, %v341
    %v356 = vpack.c.b16 %v344, %v343
    %v357 = vpack.c.b16 %v346, %v345
    %v358 = vpack.c.b16 %v348, %v347
    %v359 = vpack.c.b16 %v350, %v349
    %v360 = vpack.c.b16 %v352, %v351
    %369 = vmatprep.subr.bf16.mxu0 0
    %370 = vmatpush1.bf16.msra.mxu0 %v360
    %371 = vmatprep.subr.bf16.mxu0 0
    %372 = vmatpush1.bf16.msra.mxu0 %v359
    %373 = vmatprep.subr.bf16.mxu0 0
    %374 = vmatpush1.bf16.msra.mxu0 %v358
    %375 = vmatprep.subr.bf16.mxu0 0
    %376 = vmatpush1.bf16.msra.mxu0 %v357
    %377 = vmatprep.subr.bf16.mxu0 0
    %378 = vmatpush1.bf16.msra.mxu0 %v356
    %379 = vmatprep.subr.bf16.mxu0 0
    %380 = vmatpush1.bf16.msra.mxu0 %v355
    %381 = vmatprep.subr.bf16.mxu0 0
    %382 = vmatpush1.bf16.msra.mxu0 %v354
    %383 = vmatprep.subr.bf16.mxu0 0
    %384 = vmatpush1.bf16.msra.mxu0 %v353
    %385 = vmatprep.subr.bf16.mxu0 0
    %386 = vmatpush2.bf16.msra.mxu0 0
    %387 = vmatprep.subr.bf16.mxu0 0
    %388 = vmatpush2.bf16.msra.mxu0 0
    %389 = vmatprep.subr.bf16.mxu0 0
    %390 = vmatpush2.bf16.msra.mxu0 0
    %391 = vmatprep.subr.bf16.mxu0 0
    %392 = vmatpush2.bf16.msra.mxu0 0
    %393 = vmatprep.subr.bf16.mxu0 0
    %394 = vmatpush2.bf16.msra.mxu0 0
    %395 = vmatprep.subr.bf16.mxu0 0
    %396 = vmatpush2.bf16.msra.mxu0 0
    %397 = vmatprep.subr.bf16.mxu0 0
    %398 = vmatpush2.bf16.msra.mxu0 0
    %399 = vmatprep.subr.bf16.mxu0 0
    %400 = vmatpush2.bf16.msra.mxu0 0
    %401 = vmatprep.mubr.bf16.mxu0 0
    %402 = vmatmul.mubr.bf16.gmra.mxu0 %v304
    %v403 = vpop.f32.mrf.mxu0
    %v404 = vadd.f32 0.0, %v403
    %v405 = vpop.f32.mrf.mxu0
    %v406 = vpop.f32.mrf.mxu0
    %v407 = vpop.f32.mrf.mxu0
    %408 = vdwg.mxu0
    %409 = vst [vmem:[#allocation10] sm:$0xff] %v404
    // Predicated region
    $region42: #{tpu_custom_call.1} parent=1 // pred_check
      _
    $region43: #{tpu_custom_call.1} parent=1 // pred_check_branch
      %411 = sbr.rel (0) target = $region45
    $region44: #{tpu_custom_call.1} parent=1 // pred_region
      %s413 = ssub.s32 128, 128
      %414 = vsyncadd [#allocation4], %s413
      %s416 = sshll.u32 [#allocation10], 4
      %s417 = int_to_ptr.vmem [resolvable:$true] %s416
      %419 = dma.vmem_to_hbm [thread:$0]  %s417, 128, %s6, [#allocation4]
    $region45: #{tpu_custom_call.1} parent=1 // pred_fallthru
      _
    // Predicated region
    $region46: #{tpu_custom_call.1} parent=1 // pred_check
      _
    $region47: #{tpu_custom_call.1} parent=1 // pred_check_branch
      %421 = sbr.rel (0) target = $region49
    $region48: #{tpu_custom_call.1} parent=1 // pred_region
      %422 = dma.done [#allocation4], 128
    $region49: #{tpu_custom_call.1} parent=1 // pred_fallthru
      _
    %423 = vsyncpa [#allocation3], 1
    %424 = vsyncpa [#allocation6], 1
    %425 = vsyncpa [#allocation9], 1
    %426 = vsyncpa [#allocation4], 1

</llo_original>
